<compile_context>
chip_gen: v7x
topology: tpu7x:2x2x1
jax: 0.10.0
libtpu: 0.0.40
codegen_flags: <defaults>
</compile_context>

<pallas_src>
import functools

import jax
import jax.numpy as jnp
from jax.experimental import pallas as pl
from jax.experimental.pallas import tpu as pltpu

HIDDEN_SIZE = 32
_LANE = 128
_TILE_B = 512          # batch tile, used only when B > _TILE_B


def _make_actor_kernel(out_features: int):
    H = HIDDEN_SIZE

    def actor_kernel(x_ref, w1_ref, w2_ref, wh_ref, b_ref, out_ref):
        x = x_ref[...]                       # [tile_b, in_features]
        b = b_ref[...]                       # [3, NP]: rows = (b1 | b2 | b_heads), zero padded

        # trunk: Linear -> ReLU -> Linear -> ReLU
        h1 = jnp.dot(x, w1_ref[...], preferred_element_type=jnp.float32) + b[0:1, :H]
        h1 = jnp.maximum(h1, 0.0)
        h2 = jnp.dot(h1, w2_ref[...], preferred_element_type=jnp.float32) + b[1:2, :H]
        h2 = jnp.maximum(h2, 0.0)

        # fused heads: one matmul over the lane-padded [H, NP] weight slab
        z = jnp.dot(h2, wh_ref[...], preferred_element_type=jnp.float32) + b[2:3, :]

        # lanes [0, out) -> tanh (mean head); lanes [out, 2*out) -> softplus (variance head)
        mean_act = jnp.tanh(z)
        var_act = jnp.maximum(z, 0.0) + jnp.log1p(jnp.exp(-jnp.abs(z)))   # stable softplus
        lane = jax.lax.broadcasted_iota(jnp.int32, z.shape, 1)
        out_ref[...] = jnp.where(lane < out_features, mean_act, var_act)

    return actor_kernel


@functools.partial(jax.jit, static_argnums=(5,))
def _actor_forward(x, w1, w2, wh, b, out_features):
    B, in_f = x.shape
    H = HIDDEN_SIZE
    NP = wh.shape[1]

    # Small batches: one grid step (block == full array). Large batches: tile + pipeline,
    # batch axis marked 'parallel' so it shards across TensorCores (v7x megacore).
    if B <= _TILE_B:
        tile_b, Bp = B, B
    else:
        tile_b = _TILE_B
        Bp = -(-B // tile_b) * tile_b
        if Bp != B:
            x = jnp.pad(x, ((0, Bp - B), (0, 0)))

    grid = (Bp // tile_b,)
    vmem = pltpu.MemorySpace.VMEM

    flops = 2 * Bp * (in_f * H + H * H + H * NP)
    transcendentals = 3 * Bp * NP          # tanh + exp + log1p
    bytes_accessed = 4 * (Bp * in_f + in_f * H + H * H + H * NP + 3 * NP + Bp * NP)

    out = pl.pallas_call(
        _make_actor_kernel(out_features),
        out_shape=jax.ShapeDtypeStruct((Bp, NP), jnp.float32),
        grid_spec=pltpu.PrefetchScalarGridSpec(
            num_scalar_prefetch=0,
            grid=grid,
            in_specs=[
                pl.BlockSpec((tile_b, in_f), lambda i: (i, 0), memory_space=vmem),
                pl.BlockSpec((in_f, H), lambda i: (0, 0), memory_space=vmem),   # w1 (resident)
                pl.BlockSpec((H, H), lambda i: (0, 0), memory_space=vmem),      # w2 (resident)
                pl.BlockSpec((H, NP), lambda i: (0, 0), memory_space=vmem),     # fused heads
                pl.BlockSpec((3, NP), lambda i: (0, 0), memory_space=vmem),     # packed biases
            ],
            out_specs=pl.BlockSpec((tile_b, NP), lambda i: (i, 0), memory_space=vmem),
        ),
        compiler_params=pltpu.CompilerParams(dimension_semantics=("parallel",)),
        cost_estimate=pl.CostEstimate(
            flops=flops, transcendentals=transcendentals, bytes_accessed=bytes_accessed),
    )(x, w1, w2, wh, b)

    mean = out[:B, :out_features]
    var = out[:B, out_features:2 * out_features]
    return mean, var


def pack_params(params, out_features):
    """One-time conversion of PyTorch-layout params into the kernel's packed layout."""
    H = HIDDEN_SIZE
    NP = max(_LANE, -(-2 * out_features // _LANE) * _LANE)   # pad fused head width to 128

    w1 = jnp.asarray(params["w1"], jnp.float32).T            # [in, H]
    w2 = jnp.asarray(params["w2"], jnp.float32).T            # [H, H]

    wh = jnp.zeros((H, NP), jnp.float32)
    wh = wh.at[:, :out_features].set(jnp.asarray(params["wm"], jnp.float32).T)
    wh = wh.at[:, out_features:2 * out_features].set(jnp.asarray(params["wv"], jnp.float32).T)

    b = jnp.zeros((3, NP), jnp.float32)
    b = b.at[0, :H].set(jnp.asarray(params["b1"], jnp.float32))
    b = b.at[1, :H].set(jnp.asarray(params["b2"], jnp.float32))
    b = b.at[2, :out_features].set(jnp.asarray(params["bm"], jnp.float32))
    b = b.at[2, out_features:2 * out_features].set(jnp.asarray(params["bv"], jnp.float32))

    return {"w1": w1, "w2": w2, "wh": wh, "b": b, "out_features": int(out_features)}


def actor_forward(x, packed):
    return _actor_forward(x, packed["w1"], packed["w2"], packed["wh"], packed["b"],
                          packed["out_features"])


def init_params(key, input_shape, output_shape):
    """Deterministic init mimicking nn.Linear (uniform +/- 1/sqrt(fan_in)), PyTorch layout."""
    ks = jax.random.split(key, 8)

    def lin(kw, kb, fan_in, fan_out):
        bound = 1.0 / jnp.sqrt(jnp.float32(fan_in))
        w = jax.random.uniform(kw, (fan_out, fan_in), jnp.float32, -bound, bound)
        b = jax.random.uniform(kb, (fan_out,), jnp.float32, -bound, bound)
        return w, b

    w1, b1 = lin(ks[0], ks[1], input_shape, HIDDEN_SIZE)
    w2, b2 = lin(ks[2], ks[3], HIDDEN_SIZE, HIDDEN_SIZE)
    wm, bm = lin(ks[4], ks[5], HIDDEN_SIZE, output_shape)
    wv, bv = lin(ks[6], ks[7], HIDDEN_SIZE, output_shape)
    return {"w1": w1, "b1": b1, "w2": w2, "b2": b2,
            "wm": wm, "bm": bm, "wv": wv, "bv": bv}


if __name__ == "__main__":
    key = jax.random.PRNGKey(0)
    k_x, k_p = jax.random.split(key)

    B = 8             # batch of observations
    INPUT_SHAPE = 16  # env.observation_space.shape[0] (synthetic)
    OUTPUT_SHAPE = 4  # env.action_space.shape[0] (synthetic)

    x = jax.random.normal(k_x, (B, INPUT_SHAPE), dtype=jnp.float32)
    params = init_params(k_p, INPUT_SHAPE, OUTPUT_SHAPE)
    packed = pack_params(params, OUTPUT_SHAPE)   # one-time packing, not per call

    mean, var = actor_forward(x, packed)
    jax.block_until_ready((mean, var))

    # reference check in plain JAX (PyTorch semantics)
    def ref(x, p):
        h = jnp.maximum(x @ p["w1"].T + p["b1"], 0.0)
        h = jnp.maximum(h @ p["w2"].T + p["b2"], 0.0)
        m = jnp.tanh(h @ p["wm"].T + p["bm"])
        v = jax.nn.softplus(h @ p["wv"].T + p["bv"])
        return m, v

    m_ref, v_ref = ref(x, params)
    assert mean.shape == (B, OUTPUT_SHAPE) and var.shape == (B, OUTPUT_SHAPE)
    assert jnp.allclose(mean, m_ref, atol=1e-5, rtol=1e-5)
    assert jnp.allclose(var, v_ref, atol=1e-5, rtol=1e-5)

    print("KERNEL_OK")
</pallas_src>

<mosaic_0001>
module attributes {stable_mosaic.version = 11 : i64} {
  func.func @actor_kernel(%arg0: i32, %arg1: memref<8x16xf32, #tpu.memory_space<vmem>>, %arg2: memref<16x32xf32, #tpu.memory_space<vmem>>, %arg3: memref<32x32xf32, #tpu.memory_space<vmem>>, %arg4: memref<32x128xf32, #tpu.memory_space<vmem>>, %arg5: memref<3x128xf32, #tpu.memory_space<vmem>>, %arg6: memref<8x128xf32, #tpu.memory_space<vmem>>) attributes {dimension_semantics = [#tpu.dimension_semantics<parallel>], iteration_bounds = array<i64: 1>, scalar_prefetch = 0 : i64, scratch_operands = 0 : i64, tpu.core_type = #tpu.core_type<tc>, window_params = [{transform_indices = @transform_0, window_bounds = array<i64: 8, 16>}, {pipeline_mode = #tpu.pipeline_mode<synchronous>, transform_indices = @transform_1, window_bounds = array<i64: 16, 32>}, {pipeline_mode = #tpu.pipeline_mode<synchronous>, transform_indices = @transform_2, window_bounds = array<i64: 32, 32>}, {pipeline_mode = #tpu.pipeline_mode<synchronous>, transform_indices = @transform_3, window_bounds = array<i64: 32, 128>}, {pipeline_mode = #tpu.pipeline_mode<synchronous>, transform_indices = @transform_4, window_bounds = array<i64: 3, 128>}, {transform_indices = @transform_5, window_bounds = array<i64: 8, 128>}]} {
    %c0 = arith.constant 0 : index
    %c0_0 = arith.constant 0 : index
    %0 = vector.load %arg1[%c0, %c0_0] : memref<8x16xf32, #tpu.memory_space<vmem>>, vector<8x16xf32>
    %c0_1 = arith.constant 0 : index
    %c0_2 = arith.constant 0 : index
    %1 = vector.load %arg5[%c0_1, %c0_2] : memref<3x128xf32, #tpu.memory_space<vmem>>, vector<3x128xf32>
    %c0_3 = arith.constant 0 : index
    %c0_4 = arith.constant 0 : index
    %2 = vector.load %arg2[%c0_3, %c0_4] : memref<16x32xf32, #tpu.memory_space<vmem>>, vector<16x32xf32>
    %cst = arith.constant dense<0.000000e+00> : vector<8x32xf32>
    %3 = tpu.matmul %0, %2, %cst {dimension_numbers = #tpu.dot_dimension_numbers<[1], [0], [0], [1], [0, 0, 1, 1], [], []>} : vector<8x16xf32>, vector<16x32xf32>, vector<8x32xf32> -> vector<8x32xf32>
    %4 = vector.extract_strided_slice %1 {offsets = [0, 0], sizes = [1, 32], strides = [1, 1]} : vector<3x128xf32> to vector<1x32xf32>
    %5 = vector.broadcast %4 : vector<1x32xf32> to vector<8x32xf32>
    %6 = arith.addf %3, %5 : vector<8x32xf32>
    %cst_5 = arith.constant 0.000000e+00 : f32
    %7 = vector.broadcast %cst_5 : f32 to vector<8x32xf32>
    %8 = arith.maximumf %6, %7 : vector<8x32xf32>
    %c0_6 = arith.constant 0 : index
    %c0_7 = arith.constant 0 : index
    %9 = vector.load %arg3[%c0_6, %c0_7] : memref<32x32xf32, #tpu.memory_space<vmem>>, vector<32x32xf32>
    %cst_8 = arith.constant dense<0.000000e+00> : vector<8x32xf32>
    %10 = tpu.matmul %8, %9, %cst_8 {dimension_numbers = #tpu.dot_dimension_numbers<[1], [0], [0], [1], [0, 0, 1, 1], [], []>} : vector<8x32xf32>, vector<32x32xf32>, vector<8x32xf32> -> vector<8x32xf32>
    %11 = vector.extract_strided_slice %1 {offsets = [1, 0], sizes = [1, 32], strides = [1, 1]} : vector<3x128xf32> to vector<1x32xf32>
    %12 = vector.broadcast %11 : vector<1x32xf32> to vector<8x32xf32>
    %13 = arith.addf %10, %12 : vector<8x32xf32>
    %cst_9 = arith.constant 0.000000e+00 : f32
    %14 = vector.broadcast %cst_9 : f32 to vector<8x32xf32>
    %15 = arith.maximumf %13, %14 : vector<8x32xf32>
    %c0_10 = arith.constant 0 : index
    %c0_11 = arith.constant 0 : index
    %16 = vector.load %arg4[%c0_10, %c0_11] : memref<32x128xf32, #tpu.memory_space<vmem>>, vector<32x128xf32>
    %cst_12 = arith.constant dense<0.000000e+00> : vector<8x128xf32>
    %17 = tpu.matmul %15, %16, %cst_12 {dimension_numbers = #tpu.dot_dimension_numbers<[1], [0], [0], [1], [0, 0, 1, 1], [], []>} : vector<8x32xf32>, vector<32x128xf32>, vector<8x128xf32> -> vector<8x128xf32>
    %18 = vector.extract_strided_slice %1 {offsets = [2, 0], sizes = [1, 128], strides = [1, 1]} : vector<3x128xf32> to vector<1x128xf32>
    %19 = vector.broadcast %18 : vector<1x128xf32> to vector<8x128xf32>
    %20 = arith.addf %17, %19 : vector<8x128xf32>
    %21 = math.tanh %20 : vector<8x128xf32>
    %cst_13 = arith.constant 0.000000e+00 : f32
    %22 = vector.broadcast %cst_13 : f32 to vector<8x128xf32>
    %23 = arith.maximumf %20, %22 : vector<8x128xf32>
    %24 = math.absf %20 : vector<8x128xf32>
    %cst_14 = arith.constant 0.000000e+00 : f32
    %25 = vector.broadcast %cst_14 : f32 to vector<8x128xf32>
    %26 = arith.subf %25, %24 : vector<8x128xf32>
    %27 = math.exp %26 : vector<8x128xf32>
    %28 = math.log1p %27 : vector<8x128xf32>
    %29 = arith.addf %23, %28 : vector<8x128xf32>
    %30 = tpu.iota {dimensions = array<i32: 1>} : vector<8x128xi32>
    %c4_i32 = arith.constant 4 : i32
    %31 = vector.broadcast %c4_i32 : i32 to vector<8x128xi32>
    %32 = arith.cmpi slt, %30, %31 : vector<8x128xi32>
    %33 = arith.select %32, %21, %29 : vector<8x128xi1>, vector<8x128xf32>
    %c0_15 = arith.constant 0 : index
    %c0_16 = arith.constant 0 : index
    %34 = vector.load %arg6[%c0_15, %c0_16] : memref<8x128xf32, #tpu.memory_space<vmem>>, vector<8x128xf32>
    tpu.vector_store %arg6[%c0_15, %c0_16], %33 {strides = array<i32>} : memref<8x128xf32, #tpu.memory_space<vmem>>, vector<8x128xf32>,
    return
  }
  func.func @transform_0(%arg0: i32) -> (i32, i32) {
    %c0_i32 = arith.constant 0 : i32
    %c0_i32_0 = arith.constant 0 : i32
    return %arg0, %c0_i32 : i32, i32
  }
  func.func @transform_1(%arg0: i32) -> (i32, i32) {
    %c0_i32 = arith.constant 0 : i32
    %c0_i32_0 = arith.constant 0 : i32
    %c0_i32_1 = arith.constant 0 : i32
    return %c0_i32, %c0_i32_0 : i32, i32
  }
  func.func @transform_2(%arg0: i32) -> (i32, i32) {
    %c0_i32 = arith.constant 0 : i32
    %c0_i32_0 = arith.constant 0 : i32
    %c0_i32_1 = arith.constant 0 : i32
    return %c0_i32, %c0_i32_0 : i32, i32
  }
  func.func @transform_3(%arg0: i32) -> (i32, i32) {
    %c0_i32 = arith.constant 0 : i32
    %c0_i32_0 = arith.constant 0 : i32
    %c0_i32_1 = arith.constant 0 : i32
    return %c0_i32, %c0_i32_0 : i32, i32
  }
  func.func @transform_4(%arg0: i32) -> (i32, i32) {
    %c0_i32 = arith.constant 0 : i32
    %c0_i32_0 = arith.constant 0 : i32
    %c0_i32_1 = arith.constant 0 : i32
    return %c0_i32, %c0_i32_0 : i32, i32
  }
  func.func @transform_5(%arg0: i32) -> (i32, i32) {
    %c0_i32 = arith.constant 0 : i32
    %c0_i32_0 = arith.constant 0 : i32
    return %arg0, %c0_i32 : i32, i32
  }
}

</mosaic_0001>

<llo_original>
// kernel: _actor_forward.1
$region0: #{_actor_forward.1}
  #allocation0 [shape = 'u32[]', space=smem, size = 0x4, offset = 0x4, fixed_abs, tag = 'smem constant byte address 0x4 - core index']
  #allocation1 [shape = 'u32[144,128]{1,0:T(1,128)}', space=vmem, size = 0x12000, scoped, tag = 'internal scratch']
  %s0 = inlined_call_operand.hbm [shape: f32[8,16], index: 0, kind: input, shape index: {}]
  %s1 = inlined_call_operand.hbm [shape: f32[16,32], index: 1, kind: input, shape index: {}]
  %s2 = inlined_call_operand.hbm [shape: f32[32,32], index: 2, kind: input, shape index: {}]
  %s3 = inlined_call_operand.hbm [shape: f32[32,128], index: 3, kind: input, shape index: {}]
  %s4 = inlined_call_operand.vmem [shape: f32[3,128], index: 4, kind: input, shape index: {}]
  %s5 = inlined_call_operand.vmem [shape: f32[8,128], index: 5, kind: output, shape index: {}]
  %s6 = sld [smem:[#allocation0]]
  $region46: #{_actor_forward.1} parent=0
    _
  %s8 = ssub.s32 1, %s6
  %s9 = scalar_select 0, %s8, %s6
  $region1: #{_actor_forward.1} parent=0
    #allocation2 [shape = 'u8[4096]{0}', space=vmem, size = 0x1000, scoped, tag = 'input window, operand 0, single buffered']
    #allocation3 [shape = 's32[1]{0}', space=sflag, size = 0x4, scoped, tag = 'scoped memory for _actor_forward.1']
    #allocation4 [shape = 'u8[8192]{0}', space=vmem, size = 0x2000, scoped, tag = 'input window, operand 1, single buffered']
    #allocation5 [shape = 's32[1]{0}', space=sflag, size = 0x4, scoped, tag = 'scoped memory for _actor_forward.1']
    #allocation6 [shape = 'u8[16384]{0}', space=vmem, size = 0x4000, scoped, tag = 'input window, operand 2, single buffered']
    #allocation7 [shape = 'u8[16384]{0}', space=vmem, size = 0x4000, scoped, tag = 'input window, operand 3, single buffered']
    #allocation8 [shape = 's32[1]{0}', space=sflag, size = 0x4, scoped, tag = 'scoped memory for _actor_forward.1']
    %10 = vsyncpa [#allocation3], 0
    %11 = vsyncpa [#allocation5], 0
    %12 = vsyncpa [#allocation8], 0
    // Predicated region
    $region2: #{_actor_forward.1} parent=1 // pred_check
      _
    $region3: #{_actor_forward.1} parent=1 // pred_check_branch
      %14 = sbr.rel (0) target = $region5
    $region4: #{_actor_forward.1} parent=1 // pred_region
      %s16 = ssub.s32 128, 128
      %17 = vsyncadd [#allocation3], %s16
      %s19 = sshll.u32 [#allocation2], 4
      %s20 = int_to_ptr.vmem [resolvable:$true] %s19
      %22 = dma.hbm_to_vmem [thread:$0]  %s0, 128, %s20, [#allocation3]
    $region5: #{_actor_forward.1} parent=1 // pred_fallthru
      _
    // Predicated region
    $region6: #{_actor_forward.1} parent=1 // pred_check
      _
    $region7: #{_actor_forward.1} parent=1 // pred_check_branch
      %24 = sbr.rel (0) target = $region9
    $region8: #{_actor_forward.1} parent=1 // pred_region
      %s26 = ssub.s32 256, 256
      %27 = vsyncadd [#allocation5], %s26
      %s28 = sshll.u32 [#allocation4], 4
      %s29 = int_to_ptr.vmem [resolvable:$true] %s28
      %34 = dma.hbm_to_vmem [thread:$0]  %s1, 256, %s29, [#allocation5], 128, 128, 8
    $region9: #{_actor_forward.1} parent=1 // pred_fallthru
      _
    // Predicated region
    $region10: #{_actor_forward.1} parent=1 // pred_check
      _
    $region11: #{_actor_forward.1} parent=1 // pred_check_branch
      %36 = sbr.rel (0) target = $region13
    $region12: #{_actor_forward.1} parent=1 // pred_region
      %s38 = ssub.s32 512, 512
      %39 = vsyncadd [#allocation5], %s38
      %s40 = sshll.u32 [#allocation6], 4
      %s41 = int_to_ptr.vmem [resolvable:$true] %s40
      %46 = dma.hbm_to_vmem [thread:$0]  %s2, 512, %s41, [#allocation5], 128, 128, 8
    $region13: #{_actor_forward.1} parent=1 // pred_fallthru
      _
    // Predicated region
    $region14: #{_actor_forward.1} parent=1 // pred_check
      _
    $region15: #{_actor_forward.1} parent=1 // pred_check_branch
      %48 = sbr.rel (0) target = $region17
    $region16: #{_actor_forward.1} parent=1 // pred_region
      %s50 = ssub.s32 512, 512
      %51 = vsyncadd [#allocation8], %s50
      %s52 = sshll.u32 [#allocation7], 4
      %s53 = int_to_ptr.vmem [resolvable:$true] %s52
      %58 = dma.hbm_to_vmem [thread:$0]  %s3, 512, %s53, [#allocation8], 128, 128, 8
    $region17: #{_actor_forward.1} parent=1 // pred_fallthru
      _
    // Predicated region
    $region18: #{_actor_forward.1} parent=1 // pred_check
      _
    $region19: #{_actor_forward.1} parent=1 // pred_check_branch
      %60 = sbr.rel (0) target = $region21
    $region20: #{_actor_forward.1} parent=1 // pred_region
      _
    $region21: #{_actor_forward.1} parent=1 // pred_fallthru
      _
    // Predicated region
    $region22: #{_actor_forward.1} parent=1 // pred_check
      _
    $region23: #{_actor_forward.1} parent=1 // pred_check_branch
      %62 = sbr.rel (0) target = $region25
    $region24: #{_actor_forward.1} parent=1 // pred_region
      %63 = dma.done [#allocation3], 128
    $region25: #{_actor_forward.1} parent=1 // pred_fallthru
      _
    // Predicated region
    $region26: #{_actor_forward.1} parent=1 // pred_check
      _
    $region27: #{_actor_forward.1} parent=1 // pred_check_branch
      %65 = sbr.rel (0) target = $region29
    $region28: #{_actor_forward.1} parent=1 // pred_region
      %66 = dma.done [#allocation5], 256
    $region29: #{_actor_forward.1} parent=1 // pred_fallthru
      _
    // Predicated region
    $region30: #{_actor_forward.1} parent=1 // pred_check
      _
    $region31: #{_actor_forward.1} parent=1 // pred_check_branch
      %68 = sbr.rel (0) target = $region33
    $region32: #{_actor_forward.1} parent=1 // pred_region
      %69 = dma.done [#allocation5], 512
    $region33: #{_actor_forward.1} parent=1 // pred_fallthru
      _
    // Predicated region
    $region34: #{_actor_forward.1} parent=1 // pred_check
      _
    $region35: #{_actor_forward.1} parent=1 // pred_check_branch
      %71 = sbr.rel (0) target = $region37
    $region36: #{_actor_forward.1} parent=1 // pred_region
      %72 = dma.done [#allocation8], 512
    $region37: #{_actor_forward.1} parent=1 // pred_fallthru
      _
    %v73 = vld [vmem:[#allocation2] sm:$0xff]
    %v74 = vld [vmem:[%s4] sm:$0x7]
    %v75 = vld [vmem:[#allocation4] sm:$0xff]
    %v76 = vld [vmem:[#allocation4 + $0x8] sm:$0xff]
    %v77 = vlaneseq
    %v78 = vshrl.u32 %v77, 7
    %v79 = vsub.s32 0, %v78
    %v80 = vrot.slane %v74, %v79
    %vm81 = vcmask 130048
    %v83 = vsel %vm81, %v73, 0
    %85 = vmatprep.subr.mxu0 0.0
    %86 = vmatpush1.msra.mxu0 %v75
    %87 = vmatprep.subr.mxu0 0.0
    %88 = vmatpush1.msra.mxu0 %v76
    %89 = vmatprep.subr.mxu0 0.0
    %90 = vmatpush1.msra.mxu0 0.0
    %91 = vmatprep.subr.mxu0 0.0
    %92 = vmatpush1.msra.mxu0 0.0
    %93 = vmatprep.subr.mxu0 0.0
    %94 = vmatpush1.msra.mxu0 0.0
    %95 = vmatprep.subr.mxu0 0.0
    %96 = vmatpush1.msra.mxu0 0.0
    %97 = vmatprep.subr.mxu0 0.0
    %98 = vmatpush1.msra.mxu0 0.0
    %99 = vmatprep.subr.mxu0 0.0
    %100 = vmatpush1.msra.mxu0 0.0
    %101 = vmatprep.subr.mxu0 0.0
    %102 = vmatpush1.msra.mxu0 0.0
    %103 = vmatprep.subr.mxu0 0.0
    %104 = vmatpush1.msra.mxu0 0.0
    %105 = vmatprep.subr.mxu0 0.0
    %106 = vmatpush1.msra.mxu0 0.0
    %107 = vmatprep.subr.mxu0 0.0
    %108 = vmatpush1.msra.mxu0 0.0
    %109 = vmatprep.subr.mxu0 0.0
    %110 = vmatpush1.msra.mxu0 0.0
    %111 = vmatprep.subr.mxu0 0.0
    %112 = vmatpush1.msra.mxu0 0.0
    %113 = vmatprep.subr.mxu0 0.0
    %114 = vmatpush1.msra.mxu0 0.0
    %115 = vmatprep.subr.mxu0 0.0
    %116 = vmatpush1.msra.mxu0 0.0
    %117 = vmatprep.subr.mxu0 0.0
    %118 = vmatpush1.msra.mxu0 0.0
    %119 = vmatprep.subr.mxu0 0.0
    %120 = vmatpush1.msra.mxu0 0.0
    %121 = vmatprep.subr.mxu0 0.0
    %122 = vmatpush1.msra.mxu0 0.0
    %123 = vmatprep.subr.mxu0 0.0
    %124 = vmatpush1.msra.mxu0 0.0
    %125 = vmatprep.subr.mxu0 0.0
    %126 = vmatpush1.msra.mxu0 0.0
    %127 = vmatprep.subr.mxu0 0.0
    %128 = vmatpush1.msra.mxu0 0.0
    %129 = vmatprep.subr.mxu0 0.0
    %130 = vmatpush1.msra.mxu0 0.0
    %131 = vmatprep.subr.mxu0 0.0
    %132 = vmatpush1.msra.mxu0 0.0
    %133 = vmatprep.subr.mxu0 0.0
    %134 = vmatpush1.msra.mxu0 0.0
    %135 = vmatprep.subr.mxu0 0.0
    %136 = vmatpush1.msra.mxu0 0.0
    %137 = vmatprep.subr.mxu0 0.0
    %138 = vmatpush1.msra.mxu0 0.0
    %139 = vmatprep.subr.mxu0 0.0
    %140 = vmatpush1.msra.mxu0 0.0
    %141 = vmatprep.subr.mxu0 0.0
    %142 = vmatpush1.msra.mxu0 0.0
    %143 = vmatprep.subr.mxu0 0.0
    %144 = vmatpush1.msra.mxu0 0.0
    %145 = vmatprep.subr.mxu0 0.0
    %146 = vmatpush1.msra.mxu0 0.0
    %147 = vmatprep.subr.mxu0 0.0
    %148 = vmatpush1.msra.mxu0 0.0
    %149 = vmatprep.mubr.f32.mxu0 0.0
    %150 = vmatmul.mubr.f32.gmra.mrb[0].mxu0 %v83
    %v151 = vpop.f32.mrb[0].mxu0
    %v152 = vadd.f32 %v80, %v151
    %v153 = vpop.f32.mrb[0].mxu0
    %154 = vdwg.mxu0
    %v155 = vmax.f32 %v152, 0.0
    %v156 = vld [vmem:[#allocation6] sm:$0xff]
    %v157 = vld [vmem:[#allocation6 + $0x8] sm:$0xff]
    %v158 = vld [vmem:[#allocation6 + $0x10] sm:$0xff]
    %v159 = vld [vmem:[#allocation6 + $0x18] sm:$0xff]
    %v160 = vlaneseq
    %v161 = vshrl.u32 %v160, 7
    %v162 = vsub.s32 1, %v161
    %v163 = vrot.slane %v74, %v162
    %vm164 = vcmask 261120
    %v166 = vsel %vm164, %v155, 0
    %168 = vmatprep.subr.mxu0 0.0
    %169 = vmatpush1.msra.mxu0 %v156
    %170 = vmatprep.subr.mxu0 0.0
    %171 = vmatpush1.msra.mxu0 %v157
    %172 = vmatprep.subr.mxu0 0.0
    %173 = vmatpush1.msra.mxu0 %v158
    %174 = vmatprep.subr.mxu0 0.0
    %175 = vmatpush1.msra.mxu0 %v159
    %176 = vmatprep.subr.mxu0 0.0
    %177 = vmatpush1.msra.mxu0 0.0
    %178 = vmatprep.subr.mxu0 0.0
    %179 = vmatpush1.msra.mxu0 0.0
    %180 = vmatprep.subr.mxu0 0.0
    %181 = vmatpush1.msra.mxu0 0.0
    %182 = vmatprep.subr.mxu0 0.0
    %183 = vmatpush1.msra.mxu0 0.0
    %184 = vmatprep.subr.mxu0 0.0
    %185 = vmatpush1.msra.mxu0 0.0
    %186 = vmatprep.subr.mxu0 0.0
    %187 = vmatpush1.msra.mxu0 0.0
    %188 = vmatprep.subr.mxu0 0.0
    %189 = vmatpush1.msra.mxu0 0.0
    %190 = vmatprep.subr.mxu0 0.0
    %191 = vmatpush1.msra.mxu0 0.0
    %192 = vmatprep.subr.mxu0 0.0
    %193 = vmatpush1.msra.mxu0 0.0
    %194 = vmatprep.subr.mxu0 0.0
    %195 = vmatpush1.msra.mxu0 0.0
    %196 = vmatprep.subr.mxu0 0.0
    %197 = vmatpush1.msra.mxu0 0.0
    %198 = vmatprep.subr.mxu0 0.0
    %199 = vmatpush1.msra.mxu0 0.0
    %200 = vmatprep.subr.mxu0 0.0
    %201 = vmatpush1.msra.mxu0 0.0
    %202 = vmatprep.subr.mxu0 0.0
    %203 = vmatpush1.msra.mxu0 0.0
    %204 = vmatprep.subr.mxu0 0.0
    %205 = vmatpush1.msra.mxu0 0.0
    %206 = vmatprep.subr.mxu0 0.0
    %207 = vmatpush1.msra.mxu0 0.0
    %208 = vmatprep.subr.mxu0 0.0
    %209 = vmatpush1.msra.mxu0 0.0
    %210 = vmatprep.subr.mxu0 0.0
    %211 = vmatpush1.msra.mxu0 0.0
    %212 = vmatprep.subr.mxu0 0.0
    %213 = vmatpush1.msra.mxu0 0.0
    %214 = vmatprep.subr.mxu0 0.0
    %215 = vmatpush1.msra.mxu0 0.0
    %216 = vmatprep.subr.mxu0 0.0
    %217 = vmatpush1.msra.mxu0 0.0
    %218 = vmatprep.subr.mxu0 0.0
    %219 = vmatpush1.msra.mxu0 0.0
    %220 = vmatprep.subr.mxu0 0.0
    %221 = vmatpush1.msra.mxu0 0.0
    %222 = vmatprep.subr.mxu0 0.0
    %223 = vmatpush1.msra.mxu0 0.0
    %224 = vmatprep.subr.mxu0 0.0
    %225 = vmatpush1.msra.mxu0 0.0
    %226 = vmatprep.subr.mxu0 0.0
    %227 = vmatpush1.msra.mxu0 0.0
    %228 = vmatprep.subr.mxu0 0.0
    %229 = vmatpush1.msra.mxu0 0.0
    %230 = vmatprep.subr.mxu0 0.0
    %231 = vmatpush1.msra.mxu0 0.0
    %232 = vmatprep.mubr.f32.mxu0 0.0
    %233 = vmatmul.mubr.f32.gmra.mrb[0].mxu0 %v166
    %v234 = vpop.f32.mrb[0].mxu0
    %v235 = vadd.f32 %v163, %v234
    %v236 = vpop.f32.mrb[0].mxu0
    %237 = vdwg.mxu0
    %v238 = vmax.f32 %v235, 0.0
    %v239 = vld [vmem:[#allocation7] sm:$0xff]
    %v240 = vld [vmem:[#allocation7 + $0x8] sm:$0xff]
    %v241 = vld [vmem:[#allocation7 + $0x10] sm:$0xff]
    %v242 = vld [vmem:[#allocation7 + $0x18] sm:$0xff]
    %v243 = vlaneseq
    %v244 = vshrl.u32 %v243, 7
    %v245 = vsub.s32 2, %v244
    %v246 = vrot.slane %v74, %v245
    %v248 = vsel %vm164, %v238, 0
    %250 = vmatprep.subr.mxu0 0.0
    %251 = vmatpush1.msra.mxu0 %v239
    %252 = vmatprep.subr.mxu0 0.0
    %253 = vmatpush1.msra.mxu0 %v240
    %254 = vmatprep.subr.mxu0 0.0
    %255 = vmatpush1.msra.mxu0 %v241
    %256 = vmatprep.subr.mxu0 0.0
    %257 = vmatpush1.msra.mxu0 %v242
    %258 = vmatprep.subr.mxu0 0.0
    %259 = vmatpush1.msra.mxu0 0.0
    %260 = vmatprep.subr.mxu0 0.0
    %261 = vmatpush1.msra.mxu0 0.0
    %262 = vmatprep.subr.mxu0 0.0
    %263 = vmatpush1.msra.mxu0 0.0
    %264 = vmatprep.subr.mxu0 0.0
    %265 = vmatpush1.msra.mxu0 0.0
    %266 = vmatprep.subr.mxu0 0.0
    %267 = vmatpush1.msra.mxu0 0.0
    %268 = vmatprep.subr.mxu0 0.0
    %269 = vmatpush1.msra.mxu0 0.0
    %270 = vmatprep.subr.mxu0 0.0
    %271 = vmatpush1.msra.mxu0 0.0
    %272 = vmatprep.subr.mxu0 0.0
    %273 = vmatpush1.msra.mxu0 0.0
    %274 = vmatprep.subr.mxu0 0.0
    %275 = vmatpush1.msra.mxu0 0.0
    %276 = vmatprep.subr.mxu0 0.0
    %277 = vmatpush1.msra.mxu0 0.0
    %278 = vmatprep.subr.mxu0 0.0
    %279 = vmatpush1.msra.mxu0 0.0
    %280 = vmatprep.subr.mxu0 0.0
    %281 = vmatpush1.msra.mxu0 0.0
    %282 = vmatprep.subr.mxu0 0.0
    %283 = vmatpush1.msra.mxu0 0.0
    %284 = vmatprep.subr.mxu0 0.0
    %285 = vmatpush1.msra.mxu0 0.0
    %286 = vmatprep.subr.mxu0 0.0
    %287 = vmatpush1.msra.mxu0 0.0
    %288 = vmatprep.subr.mxu0 0.0
    %289 = vmatpush1.msra.mxu0 0.0
    %290 = vmatprep.subr.mxu0 0.0
    %291 = vmatpush1.msra.mxu0 0.0
    %292 = vmatprep.subr.mxu0 0.0
    %293 = vmatpush1.msra.mxu0 0.0
    %294 = vmatprep.subr.mxu0 0.0
    %295 = vmatpush1.msra.mxu0 0.0
    %296 = vmatprep.subr.mxu0 0.0
    %297 = vmatpush1.msra.mxu0 0.0
    %298 = vmatprep.subr.mxu0 0.0
    %299 = vmatpush1.msra.mxu0 0.0
    %300 = vmatprep.subr.mxu0 0.0
    %301 = vmatpush1.msra.mxu0 0.0
    %302 = vmatprep.subr.mxu0 0.0
    %303 = vmatpush1.msra.mxu0 0.0
    %304 = vmatprep.subr.mxu0 0.0
    %305 = vmatpush1.msra.mxu0 0.0
    %306 = vmatprep.subr.mxu0 0.0
    %307 = vmatpush1.msra.mxu0 0.0
    %308 = vmatprep.subr.mxu0 0.0
    %309 = vmatpush1.msra.mxu0 0.0
    %310 = vmatprep.subr.mxu0 0.0
    %311 = vmatpush1.msra.mxu0 0.0
    %312 = vmatprep.subr.mxu0 0.0
    %313 = vmatpush1.msra.mxu0 0.0
    %314 = vmatprep.mubr.f32.mxu0 0.0
    %315 = vmatmul.mubr.f32.gmra.mrb[0].mxu0 %v248
    %v316 = vpop.f32.mrb[0].mxu0
    %v317 = vadd.f32 %v246, %v316
    %v318 = vpop.f32.mrb[0].mxu0
    %319 = vdwg.mxu0
    %v320 = vtanh.pop %v317
    %v321 = vmax.f32 %v317, 0.0
    %v322 = vand.u32 2147483647, %v317
    %v323 = vsub.f32 0.0, %v322
    %v324 = vmul.f32 %v323, 1.442695
    %v325 = vpow.pop %v324
    %v326 = vadd.f32 %v325, 1.0
    %v327 = vlog2.pop %v326
    %v328 = vmul.f32 %v327, 0.6931472
    %v329 = vmul.f32 -0.5, %v325
    %v330 = vadd.f32 %v329, 1.0
    %v331 = vmul.f32 %v330, %v325
    %v332 = vand.u32 2147483647, %v325
    %vm333 = vcmp.lt.f32.partialorder %v332, 0.0004427343
    %v334 = vsel %vm333, %v331, %v328
    %v335 = vadd.f32 %v321, %v334
    %v336 = vlaneseq
    %v337 = vand.u32 %v336, 127
    %vm338 = vcmp.lt.s32.totalorder %v337, 4
    %v339 = vsel %vm338, %v320, %v335
    %340 = vst [vmem:[%s5] sm:$0xff] %v339
    // Predicated region
    $region38: #{_actor_forward.1} parent=1 // pred_check
      _
    $region39: #{_actor_forward.1} parent=1 // pred_check_branch
      %342 = sbr.rel (0) target = $region41
    $region40: #{_actor_forward.1} parent=1 // pred_region
      _
    $region41: #{_actor_forward.1} parent=1 // pred_fallthru
      _
    // Predicated region
    $region42: #{_actor_forward.1} parent=1 // pred_check
      _
    $region43: #{_actor_forward.1} parent=1 // pred_check_branch
      %344 = sbr.rel (0) target = $region45
    $region44: #{_actor_forward.1} parent=1 // pred_region
      _
    $region45: #{_actor_forward.1} parent=1 // pred_fallthru
      _
    %345 = vsyncpa [#allocation3], 1
    %346 = vsyncpa [#allocation5], 1
    %347 = vsyncpa [#allocation8], 1

</llo_original>
